<compile_context>
chip_gen: v5e
topology: v5e:2x2
jax: 0.10.0
libtpu: 0.0.40
codegen_flags: <defaults>
</compile_context>

<pallas_src>
import functools

import jax
import jax.numpy as jnp
from jax.experimental import pallas as pl
from jax.experimental.pallas import tpu as pltpu


def _round_up(x, m):
    return (x + m - 1) // m * m


def _attention_kernel(feat_ref, hid_ref, uw_ref, ww_ref, b_ref, aw_ref, ab_ref,
                      alpha_ref, ctx_ref, *, matmul_dtype):
    feat = feat_ref[...]                                       # (TB, L, E)
    tb, L, E = feat.shape
    A = uw_ref.shape[1]

    uw = uw_ref[...]
    ww = ww_ref[...]
    hid = hid_ref[...]
    feat_mm = feat
    if matmul_dtype is not None:
        # Only the MXU operands are cast; all elementwise math stays f32
        # (v5e's VPU/EUP have no bf16 support).
        feat_mm = feat_mm.astype(matmul_dtype)
        uw = uw.astype(matmul_dtype)
        ww = ww.astype(matmul_dtype)
        hid = hid.astype(matmul_dtype)

    # ---- u_hs = U(features): one (TB*L, E) @ (E, A) MXU matmul.
    # L is a multiple of 8 (enforced by the wrapper), so this reshape is a free
    # sublane-aligned relayout, not a VMEM copy.
    u_hs = jnp.dot(feat_mm.reshape(tb * L, E), uw,
                   preferred_element_type=jnp.float32).reshape(tb, L, A)

    # ---- w_ah = W(hidden) + (U_b + W_b): one (TB, D) @ (D, A) matmul; both
    # linear biases were folded into a single (1, A) row by prepare_params.
    w_ah = jnp.dot(hid, ww, preferred_element_type=jnp.float32) + b_ref[...]

    # combined = tanh(u_hs + w_ah.unsqueeze(1))            -- tanh on the EUP, f32.
    combined = jnp.tanh(u_hs + w_ah[:, None, :])               # (TB, L, A)

    # ---- scores = A(combined).squeeze(2): VPU multiply + XLU lane reduce over A.
    # (If the XLU reduce+repack ever shows on the critical path, this can be
    # a (TB*L, A) @ (A, 1) MXU matmul instead; here the kernel is HBM-bound.)
    # A_b comes from SMEM; it is a constant shift so softmax is unchanged, kept
    # only for faithfulness of the intermediate scores.
    scores = jnp.sum(combined * aw_ref[...], axis=-1) + ab_ref[0]   # (TB, L)

    # ---- softmax over L (lane axis). exp on the EUP; the normalization uses the
    # EUP approximate reciprocal + two Newton steps on the VPU (tiny (TB,1) tensor)
    # so f32 accuracy is preserved while the divide stays off the VPU slot.
    m = jnp.max(scores, axis=-1, keepdims=True)
    e = jnp.exp(scores - m)
    denom = jnp.sum(e, axis=-1, keepdims=True)
    inv = pl.reciprocal(denom, approx=True)
    inv = inv * (2.0 - denom * inv)
    inv = inv * (2.0 - denom * inv)
    alpha = e * inv                                             # (TB, L)

    # ---- context = sum_l alpha[b, l] * features[b, l, :]: VPU broadcast-multiply
    # + XLU sublane reduce (no M=1 batched MXU matmuls).
    ctx = jnp.sum(alpha[:, :, None] * feat.astype(jnp.float32), axis=1)   # (TB, E)

    # ---- lane-dense output slabs (last dims padded to 128 multiples by wrapper).
    Lp = alpha_ref.shape[-1]
    if Lp == L:
        alpha_ref[...] = alpha.astype(alpha_ref.dtype)
    else:
        alpha_ref[...] = jnp.zeros(alpha_ref.shape, alpha_ref.dtype)   # dense slab store
        alpha_ref[:, :L] = alpha.astype(alpha_ref.dtype)               # valid region

    Ep = ctx_ref.shape[-1]
    if Ep == E:
        ctx_ref[...] = ctx.astype(ctx_ref.dtype)
    else:
        ctx_ref[...] = jnp.zeros(ctx_ref.shape, ctx_ref.dtype)
        ctx_ref[:, :E] = ctx.astype(ctx_ref.dtype)


def _pick_block_b(B, L, E, itemsize, target_tile_bytes=2 << 20):
    """Batch tile that (a) divides B, (b) is a multiple of 8 (sublane rule for the
    2-D hidden/alpha/ctx blocks), (c) targets a ~1-4 MiB features tile, and
    (d) leaves >= 2 grid steps so the DMA pipeline overlaps and v7x's two
    TensorCores both get work. Falls back to the full batch for tiny B."""
    per_b = max(1, L * E * itemsize)
    target = max(1, target_tile_bytes // per_b)
    cands = [d for d in range(8, B, 8) if B % d == 0]   # excludes d == B -> grid >= 2
    if not cands:
        return B                                        # tiny batch: single grid step
    under = [d for d in cands if d <= target]
    return max(under) if under else min(cands)


def attention_forward(features, hidden_state, uw, ww, bias, aw, ab,
                      *, block_b=None, matmul_dtype=None):
    """features: (B, L, E), hidden_state: (B, D).
    Weights come pre-laid-out by prepare_params: uw (E, A), ww (D, A),
    bias = U_b + W_b as (1, A), aw (1, A), ab (1,) (SMEM scalar)."""
    B, L, E = features.shape
    D = hidden_state.shape[1]
    A = uw.shape[1]
    assert L % 8 == 0, "pad L to a multiple of 8 in the caller"
    # TODO(synk): pad L / add a masked tail tile for ragged L and ragged B.

    if block_b is None:
        block_b = _pick_block_b(B, L, E, features.dtype.itemsize)
    assert B % block_b == 0
    grid = (B // block_b,)

    Lp = _round_up(L, 128)      # lane-dense alpha slab
    Ep = _round_up(E, 128)      # lane-dense context slab
    out_dtype = features.dtype

    # VMEM budget: double-buffered features tile + (TB*L, A) intermediates +
    # double-buffered outputs + resident weights, with 2x headroom. Clamped to
    # stay under v7x's 64 MiB physical VMEM (v5e/v6e have 128 MiB).
    tile_bytes = 4 * (
        2 * block_b * L * E              # features tile (double buffered)
        + 2 * block_b * L * A            # u_hs / combined intermediates
        + 2 * block_b * D                # hidden tile
        + 2 * block_b * (Lp + Ep)        # output tiles
        + (E * A + D * A + 2 * A))       # resident weights / bias
    vmem_limit = int(min(max(2 * tile_bytes, 32 << 20), 64 << 20))

    flops = 2 * B * L * E * A + 2 * B * D * A + 2 * B * L * A + 2 * B * L * E
    transcendentals = B * L * A + B * L                     # tanh + exp
    bytes_accessed = 4 * (B * L * E + B * D + E * A + D * A + 2 * A + B * Lp + B * Ep)

    kernel = functools.partial(_attention_kernel, matmul_dtype=matmul_dtype)

    def wt_spec(shape):
        return pl.BlockSpec(shape, lambda i: (0,) * len(shape))

    alpha_p, ctx_p = pl.pallas_call(
        kernel,
        out_shape=(
            jax.ShapeDtypeStruct((B, Lp), out_dtype),
            jax.ShapeDtypeStruct((B, Ep), out_dtype),
        ),
        grid_spec=pltpu.PrefetchScalarGridSpec(
            num_scalar_prefetch=0,
            grid=grid,
            in_specs=[
                pl.BlockSpec((block_b, L, E), lambda i: (i, 0, 0)),   # features
                pl.BlockSpec((block_b, D), lambda i: (i, 0)),         # hidden
                wt_spec((E, A)),                                      # U weight^T
                wt_spec((D, A)),                                      # W weight^T
                wt_spec((1, A)),                                      # U_b + W_b (folded)
                wt_spec((1, A)),                                      # A weight row
                pl.BlockSpec(memory_space=pltpu.MemorySpace.SMEM),    # A bias scalar
            ],
            out_specs=[
                pl.BlockSpec((block_b, Lp), lambda i: (i, 0)),        # alpha (padded)
                pl.BlockSpec((block_b, Ep), lambda i: (i, 0)),        # context (padded)
            ],
        ),
        compiler_params=pltpu.CompilerParams(
            dimension_semantics=("parallel",),     # B-tiles shard across v7x's 2 TCs
            vmem_limit_bytes=vmem_limit),
        cost_estimate=pl.CostEstimate(
            flops=flops, transcendentals=transcendentals, bytes_accessed=bytes_accessed),
    )(features, hidden_state, uw, ww, bias, aw, ab)

    # Slice the lane padding back off outside the kernel (no-op when already dense).
    return alpha_p[:, :L], ctx_p[:, :E]


def prepare_params(params):
    """One-time layout prep, hoisted out of the call path.
    PyTorch nn.Linear (out, in) weights -> (in, out); U_b/W_b folded into one row;
    A_b as a length-1 vector destined for SMEM."""
    A = params["U_w"].shape[0]
    return (
        params["U_w"].T,                                   # (E, A)
        params["W_w"].T,                                   # (D, A)
        (params["U_b"] + params["W_b"]).reshape(1, A),     # folded bias (1, A)
        params["A_w"],                                     # (1, A) already row-shaped
        params["A_b"].reshape(1),                          # (1,) SMEM scalar
    )


def _reference(features, hidden_state, params):
    u_hs = features @ params["U_w"].T + params["U_b"]
    w_ah = hidden_state @ params["W_w"].T + params["W_b"]
    combined = jnp.tanh(u_hs + w_ah[:, None, :])
    scores = (combined @ params["A_w"].T + params["A_b"])[..., 0]
    alpha = jax.nn.softmax(scores, axis=1)
    ctx = jnp.sum(features * alpha[:, :, None], axis=1)
    return alpha, ctx


if __name__ == "__main__":
    # Small shapes consistent with the module's forward (real module uses
    # encoder_dim=2048, decoder_dim=512, attention_dim=256).
    B, L = 16, 8
    encoder_dim, decoder_dim, attention_dim = 128, 32, 32

    key = jax.random.PRNGKey(0)
    keys = jax.random.split(key, 8)

    features = jax.random.normal(keys[0], (B, L, encoder_dim), dtype=jnp.float32)
    hidden = jax.random.normal(keys[1], (B, decoder_dim), dtype=jnp.float32)

    # PyTorch nn.Linear layout: weight=(out, in), bias=(out,)
    params = {
        "W_w": 0.1 * jax.random.normal(keys[2], (attention_dim, decoder_dim), dtype=jnp.float32),
        "W_b": 0.1 * jax.random.normal(keys[3], (attention_dim,), dtype=jnp.float32),
        "U_w": 0.1 * jax.random.normal(keys[4], (attention_dim, encoder_dim), dtype=jnp.float32),
        "U_b": 0.1 * jax.random.normal(keys[5], (attention_dim,), dtype=jnp.float32),
        "A_w": 0.1 * jax.random.normal(keys[6], (1, attention_dim), dtype=jnp.float32),
        "A_b": 0.1 * jax.random.normal(keys[7], (1,), dtype=jnp.float32),
    }

    # Hoist weight relayout / bias folding out of the hot path; run it once.
    uw, ww, bias, aw, ab = jax.block_until_ready(prepare_params(params))

    fwd = jax.jit(attention_forward)
    alpha, ctx = fwd(features, hidden, uw, ww, bias, aw, ab)
    jax.block_until_ready((alpha, ctx))

    ref_alpha, ref_ctx = _reference(features, hidden, params)
    assert alpha.shape == ref_alpha.shape and ctx.shape == ref_ctx.shape
    assert jnp.allclose(alpha, ref_alpha, atol=1e-5, rtol=1e-5)
    assert jnp.allclose(ctx, ref_ctx, atol=1e-5, rtol=1e-5)

    print("KERNEL_OK")
</pallas_src>

<mosaic_0001>
module attributes {stable_mosaic.version = 11 : i64} {
  func.func @_attention_kernel(%arg0: i32, %arg1: memref<8x8x128xf32, #tpu.memory_space<vmem>>, %arg2: memref<8x32xf32, #tpu.memory_space<vmem>>, %arg3: memref<128x32xf32, #tpu.memory_space<vmem>>, %arg4: memref<32x32xf32, #tpu.memory_space<vmem>>, %arg5: memref<1x32xf32, #tpu.memory_space<vmem>>, %arg6: memref<1x32xf32, #tpu.memory_space<vmem>>, %arg7: memref<1xf32, #tpu.memory_space<smem>>, %arg8: memref<8x128xf32, #tpu.memory_space<vmem>>, %arg9: memref<8x128xf32, #tpu.memory_space<vmem>>) attributes {dimension_semantics = [#tpu.dimension_semantics<parallel>], iteration_bounds = array<i64: 2>, scalar_prefetch = 0 : i64, scratch_operands = 0 : i64, tpu.core_type = #tpu.core_type<tc>, window_params = [{transform_indices = @transform_0, window_bounds = array<i64: 8, 8, 128>}, {transform_indices = @transform_1, window_bounds = array<i64: 8, 32>}, {pipeline_mode = #tpu.pipeline_mode<synchronous>, transform_indices = @transform_2, window_bounds = array<i64: 128, 32>}, {pipeline_mode = #tpu.pipeline_mode<synchronous>, transform_indices = @transform_3, window_bounds = array<i64: 32, 32>}, {pipeline_mode = #tpu.pipeline_mode<synchronous>, transform_indices = @transform_4, window_bounds = array<i64: 1, 32>}, {pipeline_mode = #tpu.pipeline_mode<synchronous>, transform_indices = @transform_5, window_bounds = array<i64: 1, 32>}, {transform_indices = @transform_6, window_bounds = array<i64: 1>}, {transform_indices = @transform_7, window_bounds = array<i64: 8, 128>}, {transform_indices = @transform_8, window_bounds = array<i64: 8, 128>}]} {
    %c0 = arith.constant 0 : index
    %c0_0 = arith.constant 0 : index
    %c0_1 = arith.constant 0 : index
    %0 = vector.load %arg1[%c0, %c0_0, %c0_1] : memref<8x8x128xf32, #tpu.memory_space<vmem>>, vector<8x8x128xf32>
    %c0_2 = arith.constant 0 : index
    %c0_3 = arith.constant 0 : index
    %1 = vector.load %arg3[%c0_2, %c0_3] : memref<128x32xf32, #tpu.memory_space<vmem>>, vector<128x32xf32>
    %c0_4 = arith.constant 0 : index
    %c0_5 = arith.constant 0 : index
    %2 = vector.load %arg4[%c0_4, %c0_5] : memref<32x32xf32, #tpu.memory_space<vmem>>, vector<32x32xf32>
    %c0_6 = arith.constant 0 : index
    %c0_7 = arith.constant 0 : index
    %3 = vector.load %arg2[%c0_6, %c0_7] : memref<8x32xf32, #tpu.memory_space<vmem>>, vector<8x32xf32>
    %4 = vector.shape_cast %0 : vector<8x8x128xf32> to vector<64x128xf32>
    %cst = arith.constant dense<0.000000e+00> : vector<64x32xf32>
    %5 = tpu.matmul %4, %1, %cst {dimension_numbers = #tpu.dot_dimension_numbers<[1], [0], [0], [1], [0, 0, 1, 1], [], []>} : vector<64x128xf32>, vector<128x32xf32>, vector<64x32xf32> -> vector<64x32xf32>
    %6 = vector.shape_cast %5 : vector<64x32xf32> to vector<8x8x32xf32>
    %cst_8 = arith.constant dense<0.000000e+00> : vector<8x32xf32>
    %7 = tpu.matmul %3, %2, %cst_8 {dimension_numbers = #tpu.dot_dimension_numbers<[1], [0], [0], [1], [0, 0, 1, 1], [], []>} : vector<8x32xf32>, vector<32x32xf32>, vector<8x32xf32> -> vector<8x32xf32>
    %c0_9 = arith.constant 0 : index
    %c0_10 = arith.constant 0 : index
    %8 = vector.load %arg5[%c0_9, %c0_10] : memref<1x32xf32, #tpu.memory_space<vmem>>, vector<1x32xf32>
    %9 = vector.broadcast %8 : vector<1x32xf32> to vector<8x32xf32>
    %10 = arith.addf %7, %9 : vector<8x32xf32>
    %11 = vector.shape_cast %10 : vector<8x32xf32> to vector<8x1x32xf32>
    %12 = vector.broadcast %11 : vector<8x1x32xf32> to vector<8x8x32xf32>
    %13 = arith.addf %6, %12 : vector<8x8x32xf32>
    %14 = math.tanh %13 : vector<8x8x32xf32>
    %c0_11 = arith.constant 0 : index
    %c0_12 = arith.constant 0 : index
    %15 = vector.load %arg6[%c0_11, %c0_12] : memref<1x32xf32, #tpu.memory_space<vmem>>, vector<1x32xf32>
    %16 = vector.shape_cast %15 : vector<1x32xf32> to vector<1x1x32xf32>
    %17 = vector.broadcast %16 : vector<1x1x32xf32> to vector<8x8x32xf32>
    %18 = arith.mulf %14, %17 : vector<8x8x32xf32>
    %cst_13 = arith.constant dense<0.000000e+00> : vector<8x8xf32>
    %19 = vector.multi_reduction <add>, %18, %cst_13 [2] : vector<8x8x32xf32> to vector<8x8xf32>
    %c0_14 = arith.constant 0 : index
    %20 = memref.load %arg7[%c0_14] : memref<1xf32, #tpu.memory_space<smem>>
    %21 = vector.broadcast %20 : f32 to vector<8x8xf32>
    %22 = arith.addf %19, %21 : vector<8x8xf32>
    %cst_15 = arith.constant dense<0xFF800000> : vector<8xf32>
    %23 = vector.multi_reduction <maximumf>, %22, %cst_15 [1] : vector<8x8xf32> to vector<8xf32>
    %24 = vector.shape_cast %23 : vector<8xf32> to vector<8x1xf32>
    %25 = vector.broadcast %24 : vector<8x1xf32> to vector<8x8xf32>
    %26 = arith.subf %22, %25 : vector<8x8xf32>
    %27 = math.exp %26 : vector<8x8xf32>
    %cst_16 = arith.constant dense<0.000000e+00> : vector<8xf32>
    %28 = vector.multi_reduction <add>, %27, %cst_16 [1] : vector<8x8xf32> to vector<8xf32>
    %29 = vector.shape_cast %28 : vector<8xf32> to vector<8x1xf32>
    %30 = tpu.reciprocal %29 {approx = true} : vector<8x1xf32> -> vector<8x1xf32>
    %31 = arith.mulf %29, %30 : vector<8x1xf32>
    %cst_17 = arith.constant 2.000000e+00 : f32
    %32 = vector.broadcast %cst_17 : f32 to vector<8x1xf32>
    %33 = arith.subf %32, %31 : vector<8x1xf32>
    %34 = arith.mulf %30, %33 : vector<8x1xf32>
    %35 = arith.mulf %29, %34 : vector<8x1xf32>
    %cst_18 = arith.constant 2.000000e+00 : f32
    %36 = vector.broadcast %cst_18 : f32 to vector<8x1xf32>
    %37 = arith.subf %36, %35 : vector<8x1xf32>
    %38 = arith.mulf %34, %37 : vector<8x1xf32>
    %39 = vector.broadcast %38 : vector<8x1xf32> to vector<8x8xf32>
    %40 = arith.mulf %27, %39 : vector<8x8xf32>
    %41 = vector.shape_cast %40 : vector<8x8xf32> to vector<8x8x1xf32>
    %42 = vector.broadcast %41 : vector<8x8x1xf32> to vector<8x8x128xf32>
    %43 = arith.mulf %42, %0 : vector<8x8x128xf32>
    %cst_19 = arith.constant dense<0.000000e+00> : vector<8x128xf32>
    %44 = vector.multi_reduction <add>, %43, %cst_19 [1] : vector<8x8x128xf32> to vector<8x128xf32>
    %cst_20 = arith.constant 0.000000e+00 : f32
    %45 = vector.broadcast %cst_20 : f32 to vector<8x128xf32>
    %c0_21 = arith.constant 0 : index
    %c0_22 = arith.constant 0 : index
    %46 = vector.load %arg8[%c0_21, %c0_22] : memref<8x128xf32, #tpu.memory_space<vmem>>, vector<8x128xf32>
    tpu.vector_store %arg8[%c0_21, %c0_22], %45 {strides = array<i32>} : memref<8x128xf32, #tpu.memory_space<vmem>>, vector<8x128xf32>,
    %c0_23 = arith.constant 0 : index
    %c0_24 = arith.constant 0 : index
    %47 = vector.load %arg8[%c0_23, %c0_24] : memref<8x128xf32, #tpu.memory_space<vmem>>, vector<8x8xf32>
    tpu.vector_store %arg8[%c0_23, %c0_24], %40 {strides = array<i32>} : memref<8x128xf32, #tpu.memory_space<vmem>>, vector<8x8xf32>,
    %c0_25 = arith.constant 0 : index
    %c0_26 = arith.constant 0 : index
    %48 = vector.load %arg9[%c0_25, %c0_26] : memref<8x128xf32, #tpu.memory_space<vmem>>, vector<8x128xf32>
    tpu.vector_store %arg9[%c0_25, %c0_26], %44 {strides = array<i32>} : memref<8x128xf32, #tpu.memory_space<vmem>>, vector<8x128xf32>,
    return
  }
  func.func @transform_0(%arg0: i32) -> (i32, i32, i32) {
    %c0_i32 = arith.constant 0 : i32
    %c0_i32_0 = arith.constant 0 : i32
    %c0_i32_1 = arith.constant 0 : i32
    return %arg0, %c0_i32, %c0_i32_0 : i32, i32, i32
  }
  func.func @transform_1(%arg0: i32) -> (i32, i32) {
    %c0_i32 = arith.constant 0 : i32
    %c0_i32_0 = arith.constant 0 : i32
    return %arg0, %c0_i32 : i32, i32
  }
  func.func @transform_2(%arg0: i32) -> (i32, i32) {
    %c0_i32 = arith.constant 0 : i32
    %c0_i32_0 = arith.constant 0 : i32
    %c0_i32_1 = arith.constant 0 : i32
    return %c0_i32, %c0_i32_0 : i32, i32
  }
  func.func @transform_3(%arg0: i32) -> (i32, i32) {
    %c0_i32 = arith.constant 0 : i32
    %c0_i32_0 = arith.constant 0 : i32
    %c0_i32_1 = arith.constant 0 : i32
    return %c0_i32, %c0_i32_0 : i32, i32
  }
  func.func @transform_4(%arg0: i32) -> (i32, i32) {
    %c0_i32 = arith.constant 0 : i32
    %c0_i32_0 = arith.constant 0 : i32
    %c0_i32_1 = arith.constant 0 : i32
    return %c0_i32, %c0_i32_0 : i32, i32
  }
  func.func @transform_5(%arg0: i32) -> (i32, i32) {
    %c0_i32 = arith.constant 0 : i32
    %c0_i32_0 = arith.constant 0 : i32
    %c0_i32_1 = arith.constant 0 : i32
    return %c0_i32, %c0_i32_0 : i32, i32
  }
  func.func @transform_6(%arg0: i32) -> i32 {
    %c0_i32 = arith.constant 0 : i32
    %c0_i32_0 = arith.constant 0 : i32
    return %c0_i32 : i32
  }
  func.func @transform_7(%arg0: i32) -> (i32, i32) {
    %c0_i32 = arith.constant 0 : i32
    %c0_i32_0 = arith.constant 0 : i32
    return %arg0, %c0_i32 : i32, i32
  }
  func.func @transform_8(%arg0: i32) -> (i32, i32) {
    %c0_i32 = arith.constant 0 : i32
    %c0_i32_0 = arith.constant 0 : i32
    return %arg0, %c0_i32 : i32, i32
  }
}

</mosaic_0001>

<llo_original>
// kernel: attention_forward.1
$region0: #{attention_forward.1}
  #allocation0 [shape = 'u32[]', space=smem, size = 0x4, offset = 0x4, fixed_abs, tag = 'smem constant byte address 0x4 - core index']
  #allocation1 [shape = 'u32[72,128]{1,0:T(1,128)}', space=vmem, size = 0x9000, scoped, tag = 'internal scratch']
  #allocation2 [shape = 'f32[1]{0:T(128)S(6)}', space=smem, size = 0x200, scoped, tag = 'scoped memory for attention_forward.1']
  %s0 = inlined_call_operand.vmem [shape: f32[16,8,128], index: 0, kind: input, shape index: {}]
  %s1 = inlined_call_operand.hbm [shape: f32[16,32], index: 1, kind: input, shape index: {}]
  %s2 = inlined_call_operand.vmem [shape: f32[128,32], index: 2, kind: input, shape index: {}]
  %s3 = inlined_call_operand.vmem [shape: f32[32,32], index: 3, kind: input, shape index: {}]
  %s4 = inlined_call_operand.vmem [shape: f32[1,32], index: 4, kind: input, shape index: {}]
  %s5 = inlined_call_operand.vmem [shape: f32[1,32], index: 5, kind: input, shape index: {}]
  %s6 = inlined_call_operand.<no memory space> [shape: f32[1], index: 6, kind: input, shape index: {}]
  %s7 = inlined_call_operand.vmem [shape: f32[16,128], index: 7, kind: output, shape index: {0}]
  %s8 = inlined_call_operand.hbm [shape: f32[16,128], index: 8, kind: output, shape index: {1}]
  %9 = xla_tuple %s7, %s8
  %s10 = sld [smem:[#allocation0]]
  $region73: #{attention_forward.1} parent=0
    _
  %s12 = ssub.s32 1, %s10
  %s13 = scalar_select 0, %s12, %s10
  %14 = sst [smem:[#allocation2]] %s6
  $region1: #{attention_forward.1} parent=0
    #allocation3 [shape = 'u8[8192]{0}', space=vmem, size = 0x2000, scoped, tag = 'input window, operand 1']
    #allocation4 [shape = 's32[2]{0}', space=sflag, size = 0x8, scoped, tag = 'scoped memory for attention_forward.1']
    #allocation5 [shape = 's32[2]{0}', space=sflag, size = 0x8, scoped, tag = 'scoped memory for attention_forward.1']
    #allocation6 [shape = 'u8[8192]{0}', space=vmem, size = 0x2000, scoped, tag = 'output window, operand 1']
    %15 = vsyncpa [#allocation4], 0
    %s16 = scalar_lea.sflag [#allocation4], 1
    %17 = vsyncpa %s16, 0
    %18 = vsyncpa [#allocation5], 0
    %s19 = scalar_lea.sflag [#allocation5], 1
    %20 = vsyncpa %s19, 0
    loop: start=0, step=1, limit=4
    $region2: #{attention_forward.1} parent=1 // loop_pre_header
      _
    $region3: #{attention_forward.1} parent=1 // loop_header
      %s22 = sphi 0, %s26
      %p23 = scmp.ge.s32.totalorder %s22, 4
      %s32 = sphi 0, %s34
      %s35 = sphi 0, %s32
      %s36 = sphi 0, %s35
      %s52 = sphi 0, %s36
      %s58 = sphi 0, %s60
      %s61 = sphi 0, %s58
      %s62 = sphi 0, %s61
      %s78 = sphi 0, %s62
      %s82 = sphi 0, %s82
      %s84 = sphi 0, %s82
      %s85 = sphi 0, %s84
      %s99 = sphi 0, %s85
      %s103 = sphi 0, %s103
      %s105 = sphi 0, %s103
      %s106 = sphi 0, %s105
      %s120 = sphi 0, %s106
      %s124 = sphi 0, %s124
      %s126 = sphi 0, %s124
      %s127 = sphi 0, %s126
      %s141 = sphi 0, %s127
      %s145 = sphi 0, %s145
      %s147 = sphi 0, %s145
      %s148 = sphi 0, %s147
      %s162 = sphi 0, %s148
      %s166 = sphi 0, %s166
      %s168 = sphi 0, %s166
      %s169 = sphi 0, %s168
      %s183 = sphi 0, %s169
      %s189 = sphi 0, %s191
      %s192 = sphi 0, %s189
      %s193 = sphi 0, %s192
      %s209 = sphi 0, %s193
      %s215 = sphi 0, %s217
      %s218 = sphi 0, %s215
      %s219 = sphi 0, %s218
      %s235 = sphi 0, %s219
    $region4: #{attention_forward.1} parent=1 // loop_header_branch
      %25 = sbr.rel (%p23) target = $region8
    $region5: #{attention_forward.1} parent=1 // loop_body
      %s27 = ssub.s32 %s22, 1
      %s28 = ssub.s32 %s22, 2
      %s29 = sadd.s32 %s22, 1
      %s30 = ssub.s32 %s22, %s29
      %p31 = scmp.eq.s32.totalorder %s30, 0
      %s33 = sadd.s32 %s32, 1
      %s34 = scalar_select %p31, %s32, %s33
      %p37 = pneg %p31
      %p38 = scmp.eq.s32.totalorder %s22, 1
      %p39 = por %p37, %p38
      %p40 = scmp.ne.s32.totalorder %s32, %s35
      %p41 = scmp.eq.s32.totalorder %s22, 0
      %p42 = por %p40, %p41
      %p43 = scmp.ne.s32.totalorder %s32, %s35
      %p44 = scmp.eq.s32.totalorder %s27, 1
      %p45 = por %p43, %p44
      %p46 = scmp.ne.s32.totalorder %s35, %s36
      %p47 = scmp.eq.s32.totalorder %s27, 0
      %p48 = por %p46, %p47
      %p49 = scmp.ne.s32.totalorder %s35, %s36
      %p50 = scmp.eq.s32.totalorder %s28, 1
      %p51 = por %p49, %p50
      %p53 = scmp.ne.s32.totalorder %s36, %s52
      %p54 = scmp.eq.s32.totalorder %s28, 0
      %p55 = por %p53, %p54
      %s56 = ssub.s32 %s22, %s29
      %p57 = scmp.eq.s32.totalorder %s56, 0
      %s59 = sadd.s32 %s58, 1
      %s60 = scalar_select %p57, %s58, %s59
      %p63 = pneg %p57
      %p64 = scmp.eq.s32.totalorder %s22, 1
      %p65 = por %p63, %p64
      %p66 = scmp.ne.s32.totalorder %s58, %s61
      %p67 = scmp.eq.s32.totalorder %s22, 0
      %p68 = por %p66, %p67
      %p69 = scmp.ne.s32.totalorder %s58, %s61
      %p70 = scmp.eq.s32.totalorder %s27, 1
      %p71 = por %p69, %p70
      %p72 = scmp.ne.s32.totalorder %s61, %s62
      %p73 = scmp.eq.s32.totalorder %s27, 0
      %p74 = por %p72, %p73
      %p75 = scmp.ne.s32.totalorder %s61, %s62
      %p76 = scmp.eq.s32.totalorder %s28, 1
      %p77 = por %p75, %p76
      %p79 = scmp.ne.s32.totalorder %s62, %s78
      %p80 = scmp.eq.s32.totalorder %s28, 0
      %p81 = por %p79, %p80
      %s83 = sadd.s32 %s82, 1
      %p86 = scmp.eq.s32.totalorder %s22, 1
      %p87 = scmp.ne.s32.totalorder %s82, %s84
      %p88 = scmp.eq.s32.totalorder %s22, 0
      %p89 = por %p87, %p88
      %p90 = scmp.ne.s32.totalorder %s82, %s84
      %p91 = scmp.eq.s32.totalorder %s27, 1
      %p92 = por %p90, %p91
      %p93 = scmp.ne.s32.totalorder %s84, %s85
      %p94 = scmp.eq.s32.totalorder %s27, 0
      %p95 = por %p93, %p94
      %p96 = scmp.ne.s32.totalorder %s84, %s85
      %p97 = scmp.eq.s32.totalorder %s28, 1
      %p98 = por %p96, %p97
      %p100 = scmp.ne.s32.totalorder %s85, %s99
      %p101 = scmp.eq.s32.totalorder %s28, 0
      %p102 = por %p100, %p101
      %s104 = sadd.s32 %s103, 1
      %p107 = scmp.eq.s32.totalorder %s22, 1
      %p108 = scmp.ne.s32.totalorder %s103, %s105
      %p109 = scmp.eq.s32.totalorder %s22, 0
      %p110 = por %p108, %p109
      %p111 = scmp.ne.s32.totalorder %s103, %s105
      %p112 = scmp.eq.s32.totalorder %s27, 1
      %p113 = por %p111, %p112
      %p114 = scmp.ne.s32.totalorder %s105, %s106
      %p115 = scmp.eq.s32.totalorder %s27, 0
      %p116 = por %p114, %p115
      %p117 = scmp.ne.s32.totalorder %s105, %s106
      %p118 = scmp.eq.s32.totalorder %s28, 1
      %p119 = por %p117, %p118
      %p121 = scmp.ne.s32.totalorder %s106, %s120
      %p122 = scmp.eq.s32.totalorder %s28, 0
      %p123 = por %p121, %p122
      %s125 = sadd.s32 %s124, 1
      %p128 = scmp.eq.s32.totalorder %s22, 1
      %p129 = scmp.ne.s32.totalorder %s124, %s126
      %p130 = scmp.eq.s32.totalorder %s22, 0
      %p131 = por %p129, %p130
      %p132 = scmp.ne.s32.totalorder %s124, %s126
      %p133 = scmp.eq.s32.totalorder %s27, 1
      %p134 = por %p132, %p133
      %p135 = scmp.ne.s32.totalorder %s126, %s127
      %p136 = scmp.eq.s32.totalorder %s27, 0
      %p137 = por %p135, %p136
      %p138 = scmp.ne.s32.totalorder %s126, %s127
      %p139 = scmp.eq.s32.totalorder %s28, 1
      %p140 = por %p138, %p139
      %p142 = scmp.ne.s32.totalorder %s127, %s141
      %p143 = scmp.eq.s32.totalorder %s28, 0
      %p144 = por %p142, %p143
      %s146 = sadd.s32 %s145, 1
      %p149 = scmp.eq.s32.totalorder %s22, 1
      %p150 = scmp.ne.s32.totalorder %s145, %s147
      %p151 = scmp.eq.s32.totalorder %s22, 0
      %p152 = por %p150, %p151
      %p153 = scmp.ne.s32.totalorder %s145, %s147
      %p154 = scmp.eq.s32.totalorder %s27, 1
      %p155 = por %p153, %p154
      %p156 = scmp.ne.s32.totalorder %s147, %s148
      %p157 = scmp.eq.s32.totalorder %s27, 0
      %p158 = por %p156, %p157
      %p159 = scmp.ne.s32.totalorder %s147, %s148
      %p160 = scmp.eq.s32.totalorder %s28, 1
      %p161 = por %p159, %p160
      %p163 = scmp.ne.s32.totalorder %s148, %s162
      %p164 = scmp.eq.s32.totalorder %s28, 0
      %p165 = por %p163, %p164
      %s167 = sadd.s32 %s166, 1
      %p170 = scmp.eq.s32.totalorder %s22, 1
      %p171 = scmp.ne.s32.totalorder %s166, %s168
      %p172 = scmp.eq.s32.totalorder %s22, 0
      %p173 = por %p171, %p172
      %p174 = scmp.ne.s32.totalorder %s166, %s168
      %p175 = scmp.eq.s32.totalorder %s27, 1
      %p176 = por %p174, %p175
      %p177 = scmp.ne.s32.totalorder %s168, %s169
      %p178 = scmp.eq.s32.totalorder %s27, 0
      %p179 = por %p177, %p178
      %p180 = scmp.ne.s32.totalorder %s168, %s169
      %p181 = scmp.eq.s32.totalorder %s28, 1
      %p182 = por %p180, %p181
      %p184 = scmp.ne.s32.totalorder %s169, %s183
      %p185 = scmp.eq.s32.totalorder %s28, 0
      %p186 = por %p184, %p185
      %s187 = ssub.s32 %s22, %s29
      %p188 = scmp.eq.s32.totalorder %s187, 0
      %s190 = sadd.s32 %s189, 1
      %s191 = scalar_select %p188, %s189, %s190
      %p194 = pneg %p188
      %p195 = scmp.eq.s32.totalorder %s22, 1
      %p196 = por %p194, %p195
      %p197 = scmp.ne.s32.totalorder %s189, %s192
      %p198 = scmp.eq.s32.totalorder %s22, 0
      %p199 = por %p197, %p198
      %p200 = scmp.ne.s32.totalorder %s189, %s192
      %p201 = scmp.eq.s32.totalorder %s27, 1
      %p202 = por %p200, %p201
      %p203 = scmp.ne.s32.totalorder %s192, %s193
      %p204 = scmp.eq.s32.totalorder %s27, 0
      %p205 = por %p203, %p204
      %p206 = scmp.ne.s32.totalorder %s192, %s193
      %p207 = scmp.eq.s32.totalorder %s28, 1
      %p208 = por %p206, %p207
      %p210 = scmp.ne.s32.totalorder %s193, %s209
      %p211 = scmp.eq.s32.totalorder %s28, 0
      %p212 = por %p210, %p211
      %s213 = ssub.s32 %s22, %s29
      %p214 = scmp.eq.s32.totalorder %s213, 0
      %s216 = sadd.s32 %s215, 1
      %s217 = scalar_select %p214, %s215, %s216
      %p220 = pneg %p214
      %p221 = scmp.eq.s32.totalorder %s22, 1
      %p222 = por %p220, %p221
      %p223 = scmp.ne.s32.totalorder %s215, %s218
      %p224 = scmp.eq.s32.totalorder %s22, 0
      %p225 = por %p223, %p224
      %p226 = scmp.ne.s32.totalorder %s215, %s218
      %p227 = scmp.eq.s32.totalorder %s27, 1
      %p228 = por %p226, %p227
      %p229 = scmp.ne.s32.totalorder %s218, %s219
      %p230 = scmp.eq.s32.totalorder %s27, 0
      %p231 = por %p229, %p230
      %p232 = scmp.ne.s32.totalorder %s218, %s219
      %p233 = scmp.eq.s32.totalorder %s28, 1
      %p234 = por %p232, %p233
      %p236 = scmp.ne.s32.totalorder %s219, %s235
      %p237 = scmp.eq.s32.totalorder %s28, 0
      %p238 = por %p236, %p237
      %p239 = scmp.le.s32.totalorder 1, %s22
      %p240 = scmp.lt.s32.totalorder %s22, 3
      %p241 = pnand %p239, %p240
      %p242 = pneg %p241
      // Predicated region
      $region9: #{attention_forward.1} parent=5 // pred_check
        _
      $region10: #{attention_forward.1} parent=5 // pred_check_branch
        %244 = sbr.rel (%p241) target = $region12
      $region11: #{attention_forward.1} parent=5 // pred_region
        %s245 = ssub.s32 %s22, 1
        // Predicated region
        $region13: #{attention_forward.1} parent=11 // pred_check
          %p246 = pneg %p95
        $region14: #{attention_forward.1} parent=11 // pred_check_branch
          %248 = sbr.rel (%p246) target = $region16
        $region15: #{attention_forward.1} parent=11 // pred_region
          _
        $region16: #{attention_forward.1} parent=11 // pred_fallthru
          _
        // Predicated region
        $region17: #{attention_forward.1} parent=11 // pred_check
          %p249 = pneg %p116
        $region18: #{attention_forward.1} parent=11 // pred_check_branch
          %251 = sbr.rel (%p249) target = $region20
        $region19: #{attention_forward.1} parent=11 // pred_region
          _
        $region20: #{attention_forward.1} parent=11 // pred_fallthru
          _
        // Predicated region
        $region21: #{attention_forward.1} parent=11 // pred_check
          %p252 = pneg %p137
        $region22: #{attention_forward.1} parent=11 // pred_check_branch
          %254 = sbr.rel (%p252) target = $region24
        $region23: #{attention_forward.1} parent=11 // pred_region
          _
        $region24: #{attention_forward.1} parent=11 // pred_fallthru
          _
        // Predicated region
        $region25: #{attention_forward.1} parent=11 // pred_check
          %p255 = pneg %p158
        $region26: #{attention_forward.1} parent=11 // pred_check_branch
          %257 = sbr.rel (%p255) target = $region28
        $region27: #{attention_forward.1} parent=11 // pred_region
          _
        $region28: #{attention_forward.1} parent=11 // pred_fallthru
          _
        // Predicated region
        $region29: #{attention_forward.1} parent=11 // pred_check
          %p258 = pneg %p179
        $region30: #{attention_forward.1} parent=11 // pred_check_branch
          %260 = sbr.rel (%p258) target = $region32
        $region31: #{attention_forward.1} parent=11 // pred_region
          _
        $region32: #{attention_forward.1} parent=11 // pred_fallthru
          _
      $region12: #{attention_forward.1} parent=5 // pred_fallthru
        _
      %p261 = scmp.lt.s32.totalorder %s22, 2
      // Predicated region
      $region33: #{attention_forward.1} parent=5 // pred_check
        %p262 = pneg %p261
      $region34: #{attention_forward.1} parent=5 // pred_check_branch
        %264 = sbr.rel (%p262) target = $region36
      $region35: #{attention_forward.1} parent=5 // pred_region
        // Predicated region
        $region37: #{attention_forward.1} parent=35 // pred_check
          %p265 = pneg %p42
        $region38: #{attention_forward.1} parent=35 // pred_check_branch
          %267 = sbr.rel (%p265) target = $region40
        $region39: #{attention_forward.1} parent=35 // pred_region
          %s268 = smul.u32 8, %s22
          %p269 = scmp.lt.s32.totalorder %s268, 15
          %s270 = scalar_select %p269, %s268, 15
          %s271 = smul.addr %s270, 8
          %s272 = scalar_lea.vmem %s0, %s271
          %s273 = smul.u32 8, %s22
        $region40: #{attention_forward.1} parent=35 // pred_fallthru
          _
        // Predicated region
        $region41: #{attention_forward.1} parent=35 // pred_check
          %p274 = pneg %p68
        $region42: #{attention_forward.1} parent=35 // pred_check_branch
          %276 = sbr.rel (%p274) target = $region44
        $region43: #{attention_forward.1} parent=35 // pred_region
          %s277 = sand.u32 %s58, 1
          %s278 = scalar_lea.sflag [#allocation4], %s277
          %s279 = sand.u32 %s58, 1
          %s280 = smul.addr %s279, 8
          %s281 = scalar_lea.vmem [#allocation3], %s280
          %283 = vsyncadd %s278, 0
          %s284 = smul.addr %s22, 8
          %s285 = scalar_lea.hbm %s1, %s284
          %s287 = sshll.u32 %s285, 4
          %s288 = int_to_ptr.hbm [resolvable:$true] %s287
          %s289 = sshll.u32 %s281, 4
          %s290 = int_to_ptr.vmem [resolvable:$true] %s289
          %292 = dma.hbm_to_vmem [thread:$0]  %s288, 128, %s290, %s278
        $region44: #{attention_forward.1} parent=35 // pred_fallthru
          _
      $region36: #{attention_forward.1} parent=5 // pred_fallthru
        _
      %p293 = scmp.le.s32.totalorder 1, %s22
      %p294 = scmp.lt.s32.totalorder %s22, 3
      %p295 = pnand %p293, %p294
      %p296 = pneg %p295
      // Predicated region
      $region45: #{attention_forward.1} parent=5 // pred_check
        _
      $region46: #{attention_forward.1} parent=5 // pred_check_branch
        %298 = sbr.rel (%p295) target = $region48
      $region47: #{attention_forward.1} parent=5 // pred_region
        %s299 = ssub.s32 %s22, 1
        %s300 = sand.u32 %s61, 1
        %s301 = scalar_lea.sflag [#allocation4], %s300
        %s302 = sand.u32 %s61, 1
        %s303 = smul.addr %s302, 8
        %s304 = scalar_lea.vmem [#allocation3], %s303
        // Predicated region
        $region49: #{attention_forward.1} parent=47 // pred_check
          %p305 = pneg %p74
        $region50: #{attention_forward.1} parent=47 // pred_check_branch
          %307 = sbr.rel (%p305) target = $region52
        $region51: #{attention_forward.1} parent=47 // pred_region
          %309 = dma.done %s301, 128
        $region52: #{attention_forward.1} parent=47 // pred_fallthru
          _
        %s310 = smul.u32 8, %s27
        %p311 = scmp.lt.s32.totalorder %s310, 15
        %s312 = scalar_select %p311, %s310, 15
        %s313 = smul.addr %s312, 8
        %s314 = scalar_lea.vmem %s0, %s313
        %p315 = pneg %p48
        %p316 = pneg %p45
        %s317 = sand.u32 %s61, 1
        %s318 = scalar_lea.sflag [#allocation4], %s317
        %s319 = sand.u32 %s61, 1
        %s320 = smul.addr %s319, 8
        %s321 = scalar_lea.vmem [#allocation3], %s320
        %p322 = pneg %p74
        %p323 = pneg %p71
        %p324 = pneg %p95
        %p325 = pneg %p92
        %p326 = pneg %p116
        %p327 = pneg %p113
        %p328 = pneg %p137
        %p329 = pneg %p134
        %p330 = pneg %p158
        %p331 = pneg %p155
        %p332 = pneg %p179
        %p333 = pneg %p176
        %p334 = pneg %p205
        %p335 = pneg %p202
        %p336 = scmp.lt.s32.totalorder %s27, 1
        %s337 = scalar_select %p336, %s27, 1
        %s338 = smul.addr %s337, 8
        %s339 = scalar_lea.vmem %s7, %s338
        %p340 = pneg %p231
        %p341 = pneg %p228
        %s342 = sand.u32 %s218, 1
        %s343 = scalar_lea.sflag [#allocation5], %s342
        %s344 = sand.u32 %s218, 1
        %s345 = smul.addr %s344, 8
        %s346 = scalar_lea.vmem [#allocation6], %s345
        %s347 = smul.u32 8, %s27
        %p348 = scmp.lt.s32.totalorder %s347, 15
        %s349 = scalar_select %p348, %s347, 15
        %s350 = smul.addr %s349, 8
        %s351 = scalar_lea.vmem %s0, %s350
        %s352 = smul.u32 8, %s27
        %p353 = scmp.lt.s32.totalorder %s27, 1
        %s354 = scalar_select %p353, %s27, 1
        %s355 = smul.addr %s354, 8
        %s356 = scalar_lea.vmem %s7, %s355
        %v357 = vld [vmem:[%s351] sm:$0xff]
        %v358 = vld [vmem:[%s351 + $0x8] sm:$0xff]
        %v359 = vld [vmem:[%s351 + $0x10] sm:$0xff]
        %v360 = vld [vmem:[%s351 + $0x18] sm:$0xff]
        %v361 = vld [vmem:[%s351 + $0x20] sm:$0xff]
        %v362 = vld [vmem:[%s351 + $0x28] sm:$0xff]
        %v363 = vld [vmem:[%s351 + $0x30] sm:$0xff]
        %v364 = vld [vmem:[%s351 + $0x38] sm:$0xff]
        %v365 = vld [vmem:[%s2] sm:$0xff]
        %v366 = vld [vmem:[%s2 + $0x8] sm:$0xff]
        %v367 = vld [vmem:[%s2 + $0x10] sm:$0xff]
        %v368 = vld [vmem:[%s2 + $0x18] sm:$0xff]
        %v369 = vld [vmem:[%s2 + $0x20] sm:$0xff]
        %v370 = vld [vmem:[%s2 + $0x28] sm:$0xff]
        %v371 = vld [vmem:[%s2 + $0x30] sm:$0xff]
        %v372 = vld [vmem:[%s2 + $0x38] sm:$0xff]
        %v373 = vld [vmem:[%s2 + $0x40] sm:$0xff]
        %v374 = vld [vmem:[%s2 + $0x48] sm:$0xff]
        %v375 = vld [vmem:[%s2 + $0x50] sm:$0xff]
        %v376 = vld [vmem:[%s2 + $0x58] sm:$0xff]
        %v377 = vld [vmem:[%s2 + $0x60] sm:$0xff]
        %v378 = vld [vmem:[%s2 + $0x68] sm:$0xff]
        %v379 = vld [vmem:[%s2 + $0x70] sm:$0xff]
        %v380 = vld [vmem:[%s2 + $0x78] sm:$0xff]
        %v381 = vld [vmem:[%s3] sm:$0xff]
        %v382 = vld [vmem:[%s3 + $0x8] sm:$0xff]
        %v383 = vld [vmem:[%s3 + $0x10] sm:$0xff]
        %v384 = vld [vmem:[%s3 + $0x18] sm:$0xff]
        %v385 = vld [vmem:[%s304] sm:$0xff]
        %386 = vmatpush.msra.mxu0 %v380
        %387 = vmatpush.msra.mxu0 %v379
        %388 = vmatpush.msra.mxu0 %v378
        %389 = vmatpush.msra.mxu0 %v377
        %390 = vmatpush.msra.mxu0 %v376
        %391 = vmatpush.msra.mxu0 %v375
        %392 = vmatpush.msra.mxu0 %v374
        %393 = vmatpush.msra.mxu0 %v373
        %394 = vmatpush.msra.mxu0 %v372
        %395 = vmatpush.msra.mxu0 %v371
        %396 = vmatpush.msra.mxu0 %v370
        %397 = vmatpush.msra.mxu0 %v369
        %398 = vmatpush.msra.mxu0 %v368
        %399 = vmatpush.msra.mxu0 %v367
        %400 = vmatpush.msra.mxu0 %v366
        %401 = vmatpush.msra.mxu0 %v365
        %402 = vmatmul.f32.gmra.mxu0 %v357
        %v403 = vpop.f32.mrf.mxu0
        %v404 = vadd.f32 0.0, %v403
        %405 = vmatmul.f32.gmra.mxu0 %v358
        %v406 = vpop.f32.mrf.mxu0
        %v407 = vadd.f32 0.0, %v406
        %408 = vmatmul.f32.gmra.mxu0 %v359
        %v409 = vpop.f32.mrf.mxu0
        %v410 = vadd.f32 0.0, %v409
        %411 = vmatmul.f32.gmra.mxu0 %v360
        %v412 = vpop.f32.mrf.mxu0
        %v413 = vadd.f32 0.0, %v412
        %414 = vmatmul.f32.gmra.mxu0 %v361
        %v415 = vpop.f32.mrf.mxu0
        %v416 = vadd.f32 0.0, %v415
        %417 = vmatmul.f32.gmra.mxu0 %v362
        %v418 = vpop.f32.mrf.mxu0
        %v419 = vadd.f32 0.0, %v418
        %420 = vmatmul.f32.gmra.mxu0 %v363
        %v421 = vpop.f32.mrf.mxu0
        %v422 = vadd.f32 0.0, %v421
        %423 = vmatmul.f32.gmra.mxu0 %v364
        %v424 = vpop.f32.mrf.mxu0
        %v425 = vadd.f32 0.0, %v424
        %426 = vdwg.mxu0
        %v427 = vld [vmem:[%s4] sm:$0x1]
        %v429 = vperm.slane %v427, 0
        %vm431 = vcmask 261120
        %v433 = vsel %vm431, %v385, 0
        %435 = vmatpush.msra.mxu0 0.0
        %436 = vmatpush.msra.mxu0 0.0
        %437 = vmatpush.msra.mxu0 0.0
        %438 = vmatpush.msra.mxu0 0.0
        %439 = vmatpush.msra.mxu0 0.0
        %440 = vmatpush.msra.mxu0 0.0
        %441 = vmatpush.msra.mxu0 0.0
        %442 = vmatpush.msra.mxu0 0.0
        %443 = vmatpush.msra.mxu0 0.0
        %444 = vmatpush.msra.mxu0 0.0
        %445 = vmatpush.msra.mxu0 0.0
        %446 = vmatpush.msra.mxu0 0.0
        %447 = vmatpush.msra.mxu0 %v384
        %448 = vmatpush.msra.mxu0 %v383
        %449 = vmatpush.msra.mxu0 %v382
        %450 = vmatpush.msra.mxu0 %v381
        %451 = vmatmul.f32.gmra.mxu0 %v433
        %v452 = vpop.f32.mrf.mxu0
        %v453 = vadd.f32 %v429, %v452
        %454 = vdwg.mxu0
        %v456 = vrot.slane %v453, 1
        %v457 = vrot.slane %v453, 2
        %v458 = vrot.slane %v453, 3
        %v459 = vrot.slane %v453, 4
        %v460 = vrot.slane %v453, 5
        %v461 = vrot.slane %v453, 6
        %v462 = vrot.slane %v453, 7
        %v463 = vperm.slane %v453, 0
        %v464 = vperm.slane %v456, 0
        %v465 = vperm.slane %v457, 0
        %v466 = vperm.slane %v458, 0
        %v467 = vperm.slane %v459, 0
        %v468 = vperm.slane %v460, 0
        %v469 = vperm.slane %v461, 0
        %v470 = vperm.slane %v462, 0
        %v479 = vadd.f32 %v404, %v463
        %v480 = vadd.f32 %v407, %v464
        %v481 = vadd.f32 %v410, %v465
        %v482 = vadd.f32 %v413, %v466
        %v483 = vadd.f32 %v416, %v467
        %v484 = vadd.f32 %v419, %v468
        %v485 = vadd.f32 %v422, %v469
        %v486 = vadd.f32 %v425, %v470
        %v487 = vtanh.pop %v479
        %v488 = vtanh.pop %v480
        %v489 = vtanh.pop %v481
        %v490 = vtanh.pop %v482
        %v491 = vtanh.pop %v483
        %v492 = vtanh.pop %v484
        %v493 = vtanh.pop %v485
        %v494 = vtanh.pop %v486
        %v495 = vld [vmem:[%s5] sm:$0x1]
        %v497 = vperm.slane %v495, 0
        %v499 = vmul.f32 %v487, %v497
        %v500 = vmul.f32 %v488, %v497
        %v501 = vmul.f32 %v489, %v497
        %v502 = vmul.f32 %v490, %v497
        %v503 = vmul.f32 %v491, %v497
        %v504 = vmul.f32 %v492, %v497
        %v505 = vmul.f32 %v493, %v497
        %v506 = vmul.f32 %v494, %v497
        %v507 = vsel %vm431, %v499, 0.0
        %508 = vadd.xlane.f32.xlu0 %v507
        %v509 = vpop.xlane.xlu0 %508
        %v510 = vsel %vm431, %v500, 0.0
        %511 = vadd.xlane.f32.xlu0 %v510
        %v512 = vpop.xlane.xlu0 %511
        %v513 = vsel %vm431, %v501, 0.0
        %514 = vadd.xlane.f32.xlu0 %v513
        %v515 = vpop.xlane.xlu0 %514
        %v516 = vsel %vm431, %v502, 0.0
        %517 = vadd.xlane.f32.xlu0 %v516
        %v518 = vpop.xlane.xlu0 %517
        %v519 = vsel %vm431, %v503, 0.0
        %520 = vadd.xlane.f32.xlu0 %v519
        %v521 = vpop.xlane.xlu0 %520
        %v522 = vsel %vm431, %v504, 0.0
        %523 = vadd.xlane.f32.xlu0 %v522
        %v524 = vpop.xlane.xlu0 %523
        %v525 = vsel %vm431, %v505, 0.0
        %526 = vadd.xlane.f32.xlu0 %v525
        %v527 = vpop.xlane.xlu0 %526
        %v528 = vsel %vm431, %v506, 0.0
        %529 = vadd.xlane.f32.xlu0 %v528
        %v530 = vpop.xlane.xlu0 %529
        %s531 = sld [smem:[#allocation2]]
        %v532 = vstv %s531
        %v533 = vadd.f32 %v509, %v532
        %v534 = vadd.f32 %v512, %v532
        %v535 = vadd.f32 %v515, %v532
        %v536 = vadd.f32 %v518, %v532
        %v537 = vadd.f32 %v521, %v532
        %v538 = vadd.f32 %v524, %v532
        %v539 = vadd.f32 %v527, %v532
        %v540 = vadd.f32 %v530, %v532
        %v549 = vlaneseq
        %v550 = vand.u32 %v549, 127
        %v551 = vperm.slane %v533, %v550
        %v552 = vperm.slane %v534, %v550
        %v553 = vperm.slane %v535, %v550
        %v554 = vperm.slane %v536, %v550
        %v555 = vperm.slane %v537, %v550
        %v556 = vperm.slane %v538, %v550
        %v557 = vperm.slane %v539, %v550
        %v558 = vperm.slane %v540, %v550
        %vm559 = vcmask 1041409
        %v560 = vsel %vm559, %v552, %v551
        %vm561 = vcmask 1042434
        %v562 = vsel %vm561, %v553, %v560
        %vm563 = vcmask 1043459
        %v564 = vsel %vm563, %v554, %v562
        %vm565 = vcmask 1044484
        %v566 = vsel %vm565, %v555, %v564
        %vm567 = vcmask 1045509
        %v568 = vsel %vm567, %v556, %v566
        %vm569 = vcmask 1046534
        %v570 = vsel %vm569, %v557, %v568
        %vm571 = vcmask 1047559
        %v572 = vsel %vm571, %v558, %v570
        %vm574 = vcmask 64512
        %v575 = vsel %vm574, %v572, -inf
        %576 = vmax.xlane.f32.xlu0 %v575
        %v577 = vpop.xlane.xlu0 %576
        %v579 = vperm.slane %v577, 0
        %v580 = vperm.slane %v577, 1
        %v581 = vperm.slane %v577, 2
        %v582 = vperm.slane %v577, 3
        %v583 = vperm.slane %v577, 4
        %v584 = vperm.slane %v577, 5
        %v585 = vperm.slane %v577, 6
        %v586 = vperm.slane %v577, 7
        %v595 = vsub.f32 %v533, %v579
        %v596 = vsub.f32 %v534, %v580
        %v597 = vsub.f32 %v535, %v581
        %v598 = vsub.f32 %v536, %v582
        %v599 = vsub.f32 %v537, %v583
        %v600 = vsub.f32 %v538, %v584
        %v601 = vsub.f32 %v539, %v585
        %v602 = vsub.f32 %v540, %v586
        %v603 = vmul.f32 %v595, 1.442695
        %v604 = vpow.pop %v603
        %v605 = vmul.f32 %v596, 1.442695
        %v606 = vpow.pop %v605
        %v607 = vmul.f32 %v597, 1.442695
        %v608 = vpow.pop %v607
        %v609 = vmul.f32 %v598, 1.442695
        %v610 = vpow.pop %v609
        %v611 = vmul.f32 %v599, 1.442695
        %v612 = vpow.pop %v611
        %v613 = vmul.f32 %v600, 1.442695
        %v614 = vpow.pop %v613
        %v615 = vmul.f32 %v601, 1.442695
        %v616 = vpow.pop %v615
        %v617 = vmul.f32 %v602, 1.442695
        %v618 = vpow.pop %v617
        %627 = vset.pattern.permute.xlu0 0
        %628 = vperm.xlu0 %627, %v604
        %v629 = vpop.permute.xlu0 %628
        %630 = vset.pattern.permute.xlu0 0
        %631 = vperm.xlu0 %630, %v606
        %v632 = vpop.permute.xlu0 %631
        %633 = vset.pattern.permute.xlu0 0
        %634 = vperm.xlu0 %633, %v608
        %v635 = vpop.permute.xlu0 %634
        %636 = vset.pattern.permute.xlu0 0
        %637 = vperm.xlu0 %636, %v610
        %v638 = vpop.permute.xlu0 %637
        %639 = vset.pattern.permute.xlu0 0
        %640 = vperm.xlu0 %639, %v612
        %v641 = vpop.permute.xlu0 %640
        %642 = vset.pattern.permute.xlu0 0
        %643 = vperm.xlu0 %642, %v614
        %v644 = vpop.permute.xlu0 %643
        %645 = vset.pattern.permute.xlu0 0
        %646 = vperm.xlu0 %645, %v616
        %v647 = vpop.permute.xlu0 %646
        %648 = vset.pattern.permute.xlu0 0
        %649 = vperm.xlu0 %648, %v618
        %v650 = vpop.permute.xlu0 %649
        %v651 = vperm.slane %v629, %v550
        %v652 = vperm.slane %v632, %v550
        %v653 = vperm.slane %v635, %v550
        %v654 = vperm.slane %v638, %v550
        %v655 = vperm.slane %v641, %v550
        %v656 = vperm.slane %v644, %v550
        %v657 = vperm.slane %v647, %v550
        %v658 = vperm.slane %v650, %v550
        %v659 = vsel %vm559, %v652, %v651
        %v660 = vsel %vm561, %v653, %v659
        %v661 = vsel %vm563, %v654, %v660
        %v662 = vsel %vm565, %v655, %v661
        %v663 = vsel %vm567, %v656, %v662
        %v664 = vsel %vm569, %v657, %v663
        %v665 = vsel %vm571, %v658, %v664
        %v667 = vsel %vm574, %v665, 0.0
        %668 = vadd.xlane.f32.xlu0 %v667
        %v669 = vpop.xlane.xlu0 %668
        %v670 = vrcp.pop %v669
        %v671 = vmul.f32 %v669, %v670
        %v672 = vsub.f32 2.0, %v671
        %v673 = vmul.f32 %v670, %v672
        %v674 = vmul.f32 %v669, %v673
        %v675 = vsub.f32 2.0, %v674
        %v676 = vmul.f32 %v673, %v675
        %v678 = vperm.slane %v676, 0
        %v679 = vperm.slane %v676, 1
        %v680 = vperm.slane %v676, 2
        %v681 = vperm.slane %v676, 3
        %v682 = vperm.slane %v676, 4
        %v683 = vperm.slane %v676, 5
        %v684 = vperm.slane %v676, 6
        %v685 = vperm.slane %v676, 7
        %v694 = vmul.f32 %v604, %v678
        %v695 = vmul.f32 %v606, %v679
        %v696 = vmul.f32 %v608, %v680
        %v697 = vmul.f32 %v610, %v681
        %v698 = vmul.f32 %v612, %v682
        %v699 = vmul.f32 %v614, %v683
        %v700 = vmul.f32 %v616, %v684
        %v701 = vmul.f32 %v618, %v685
        %703 = vset.pattern.permute.xlu0 0
        %704 = vperm.xlu0 %703, %v694
        %v705 = vpop.permute.xlu0 %704
        %708 = vset.pattern.permute.xlu0 0
        %709 = vperm.xlu0 %708, %v695
        %v710 = vpop.permute.xlu0 %709
        %713 = vset.pattern.permute.xlu0 0
        %714 = vperm.xlu0 %713, %v696
        %v715 = vpop.permute.xlu0 %714
        %718 = vset.pattern.permute.xlu0 0
        %719 = vperm.xlu0 %718, %v697
        %v720 = vpop.permute.xlu0 %719
        %723 = vset.pattern.permute.xlu0 0
        %724 = vperm.xlu0 %723, %v698
        %v725 = vpop.permute.xlu0 %724
        %728 = vset.pattern.permute.xlu0 0
        %729 = vperm.xlu0 %728, %v699
        %v730 = vpop.permute.xlu0 %729
        %733 = vset.pattern.permute.xlu0 0
        %734 = vperm.xlu0 %733, %v700
        %v735 = vpop.permute.xlu0 %734
        %738 = vset.pattern.permute.xlu0 0
        %739 = vperm.xlu0 %738, %v701
        %v740 = vpop.permute.xlu0 %739
        %v742 = vmul.f32 %v705, %v357
        %v743 = vmul.f32 %v710, %v358
        %v744 = vmul.f32 %v715, %v359
        %v745 = vmul.f32 %v720, %v360
        %v746 = vmul.f32 %v725, %v361
        %v747 = vmul.f32 %v730, %v362
        %v748 = vmul.f32 %v735, %v363
        %v749 = vmul.f32 %v740, %v364
        %v750 = vrot.slane %v742, 4
        %v751 = vadd.f32 %v742, %v750
        %v752 = vrot.slane %v751, 2
        %v753 = vadd.f32 %v751, %v752
        %v754 = vrot.slane %v753, 1
        %v755 = vadd.f32 %v753, %v754
        %v756 = vrot.slane %v743, 4
        %v757 = vadd.f32 %v743, %v756
        %v758 = vrot.slane %v757, 2
        %v759 = vadd.f32 %v757, %v758
        %v760 = vrot.slane %v759, 1
        %v761 = vadd.f32 %v759, %v760
        %v762 = vrot.slane %v744, 4
        %v763 = vadd.f32 %v744, %v762
        %v764 = vrot.slane %v763, 2
        %v765 = vadd.f32 %v763, %v764
        %v766 = vrot.slane %v765, 1
        %v767 = vadd.f32 %v765, %v766
        %v768 = vrot.slane %v745, 4
        %v769 = vadd.f32 %v745, %v768
        %v770 = vrot.slane %v769, 2
        %v771 = vadd.f32 %v769, %v770
        %v772 = vrot.slane %v771, 1
        %v773 = vadd.f32 %v771, %v772
        %v774 = vrot.slane %v746, 4
        %v775 = vadd.f32 %v746, %v774
        %v776 = vrot.slane %v775, 2
        %v777 = vadd.f32 %v775, %v776
        %v778 = vrot.slane %v777, 1
        %v779 = vadd.f32 %v777, %v778
        %v780 = vrot.slane %v747, 4
        %v781 = vadd.f32 %v747, %v780
        %v782 = vrot.slane %v781, 2
        %v783 = vadd.f32 %v781, %v782
        %v784 = vrot.slane %v783, 1
        %v785 = vadd.f32 %v783, %v784
        %v786 = vrot.slane %v748, 4
        %v787 = vadd.f32 %v748, %v786
        %v788 = vrot.slane %v787, 2
        %v789 = vadd.f32 %v787, %v788
        %v790 = vrot.slane %v789, 1
        %v791 = vadd.f32 %v789, %v790
        %v792 = vrot.slane %v749, 4
        %v793 = vadd.f32 %v749, %v792
        %v794 = vrot.slane %v793, 2
        %v795 = vadd.f32 %v793, %v794
        %v796 = vrot.slane %v795, 1
        %v797 = vadd.f32 %v795, %v796
        %798 = vst [vmem:[%s356] sm:$0xff] 0.0
        %v799 = vperm.slane %v705, %v550
        %v800 = vperm.slane %v710, %v550
        %v801 = vperm.slane %v715, %v550
        %v802 = vperm.slane %v720, %v550
        %v803 = vperm.slane %v725, %v550
        %v804 = vperm.slane %v730, %v550
        %v805 = vperm.slane %v735, %v550
        %v806 = vperm.slane %v740, %v550
        %v807 = vsel %vm559, %v800, %v799
        %v808 = vsel %vm561, %v801, %v807
        %v809 = vsel %vm563, %v802, %v808
        %v810 = vsel %vm565, %v803, %v809
        %v811 = vsel %vm567, %v804, %v810
        %v812 = vsel %vm569, %v805, %v811
        %v813 = vsel %vm571, %v806, %v812
        %815 = vst.msk [vmem:[%s356] sm:$0xff] %vm574, %v813
        %v824 = vsel %vm559, %v761, %v755
        %v825 = vsel %vm561, %v767, %v824
        %v826 = vsel %vm563, %v773, %v825
        %v827 = vsel %vm565, %v779, %v826
        %v828 = vsel %vm567, %v785, %v827
        %v829 = vsel %vm569, %v791, %v828
        %v830 = vsel %vm571, %v797, %v829
        %832 = vst [vmem:[%s346] sm:$0xff] %v830
        %p833 = scmp.lt.s32.totalorder %s27, 1
        %s834 = scalar_select %p833, %s27, 1
        %s835 = smul.addr %s834, 8
        %s836 = scalar_lea.vmem %s7, %s835
        %s837 = sand.u32 %s218, 1
        %s838 = scalar_lea.sflag [#allocation5], %s837
        %s839 = sand.u32 %s218, 1
        %s840 = smul.addr %s839, 8
        %s841 = scalar_lea.vmem [#allocation6], %s840
        // Predicated region
        $region53: #{attention_forward.1} parent=47 // pred_check
          %p842 = pneg %p202
        $region54: #{attention_forward.1} parent=47 // pred_check_branch
          %844 = sbr.rel (%p842) target = $region56
        $region55: #{attention_forward.1} parent=47 // pred_region
          _
        $region56: #{attention_forward.1} parent=47 // pred_fallthru
          _
        // Predicated region
        $region57: #{attention_forward.1} parent=47 // pred_check
          %p845 = pneg %p228
        $region58: #{attention_forward.1} parent=47 // pred_check_branch
          %847 = sbr.rel (%p845) target = $region60
        $region59: #{attention_forward.1} parent=47 // pred_region
          %849 = vsyncadd %s838, 0
          %s850 = smul.addr %s27, 8
          %s851 = scalar_lea.hbm %s8, %s850
          %s853 = sshll.u32 %s841, 4
          %s854 = int_to_ptr.vmem [resolvable:$true] %s853
          %s855 = sshll.u32 %s851, 4
          %s856 = int_to_ptr.hbm [resolvable:$true] %s855
          %858 = dma.vmem_to_hbm [thread:$0]  %s854, 128, %s856, %s838
        $region60: #{attention_forward.1} parent=47 // pred_fallthru
          _
      $region48: #{attention_forward.1} parent=5 // pred_fallthru
        _
      %p859 = scmp.le.s32.totalorder 2, %s22
      // Predicated region
      $region61: #{attention_forward.1} parent=5 // pred_check
        %p860 = pneg %p859
      $region62: #{attention_forward.1} parent=5 // pred_check_branch
        %862 = sbr.rel (%p860) target = $region64
      $region63: #{attention_forward.1} parent=5 // pred_region
        %s863 = ssub.s32 %s22, 2
        // Predicated region
        $region65: #{attention_forward.1} parent=63 // pred_check
          %p864 = pneg %p208
        $region66: #{attention_forward.1} parent=63 // pred_check_branch
          %866 = sbr.rel (%p864) target = $region68
        $region67: #{attention_forward.1} parent=63 // pred_region
          %p867 = scmp.lt.s32.totalorder %s28, 1
          %s868 = scalar_select %p867, %s28, 1
          %s869 = smul.addr %s868, 8
          %s870 = scalar_lea.vmem %s7, %s869
        $region68: #{attention_forward.1} parent=63 // pred_fallthru
          _
        // Predicated region
        $region69: #{attention_forward.1} parent=63 // pred_check
          %p871 = pneg %p234
        $region70: #{attention_forward.1} parent=63 // pred_check_branch
          %873 = sbr.rel (%p871) target = $region72
        $region71: #{attention_forward.1} parent=63 // pred_region
          %s874 = sand.u32 %s219, 1
          %s875 = scalar_lea.sflag [#allocation5], %s874
          %s876 = sand.u32 %s219, 1
          %s877 = smul.addr %s876, 8
          %s878 = scalar_lea.vmem [#allocation6], %s877
          %880 = dma.done %s875, 128
        $region72: #{attention_forward.1} parent=63 // pred_fallthru
          _
      $region64: #{attention_forward.1} parent=5 // pred_fallthru
        _
    $region6: #{attention_forward.1} parent=1 // loop_footer
      %s26 = sadd.s32 1, %s22
    $region7: #{attention_forward.1} parent=1 // loop_footer_branch
      %21 = sbr.rel target = $region3
    $region8: #{attention_forward.1} parent=1 // loop_exit
      _
    %881 = vsyncpa [#allocation4], 1
    %s882 = scalar_lea.sflag [#allocation4], 1
    %883 = vsyncpa %s882, 1
    %884 = vsyncpa [#allocation5], 1
    %s885 = scalar_lea.sflag [#allocation5], 1
    %886 = vsyncpa %s885, 1

</llo_original>
